<compile_context>
chip_gen: v6e
topology: v6e:2x2x1
jax: 0.10.0
libtpu: 0.0.40
codegen_flags: <defaults>
</compile_context>

<pallas_src>
import functools

import jax
import jax.numpy as jnp
from jax import lax
from jax.experimental import pallas as pl
from jax.experimental.pallas import tpu as pltpu


def _convblock_kernel(cols_ref, w_ref, out_ref, sum_ref, sumsq_ref, *,
                      eps, tile_hw, hw_total):
    # cols_ref: (CKKp, tHW)  bf16  -- one HW tile of the im2col slab for batch n
    # w_ref:    (tCo,  CKKp) bf16  -- one C_out tile of flattened conv weights
    # out_ref:  (tCo,  HW)   f32   -- VMEM-resident across the HW grid axis
    # sum_ref, sumsq_ref: (tCo, 1) f32 scratch -- streaming InstanceNorm stats
    t = pl.program_id(2)
    n_hw = pl.num_programs(2)

    @pl.when(t == 0)
    def _init():
        sum_ref[...] = jnp.zeros_like(sum_ref)
        sumsq_ref[...] = jnp.zeros_like(sumsq_ref)

    # Conv-as-matmul on the MXU: bf16 operands, f32 accumulation.
    y = jnp.dot(w_ref[...], cols_ref[...], preferred_element_type=jnp.float32)

    # Streaming per-channel stats over HW (f32 accumulation).
    sum_ref[...] += jnp.sum(y, axis=-1, keepdims=True)
    sumsq_ref[...] += jnp.sum(y * y, axis=-1, keepdims=True)

    # Stash the raw conv tile into the resident output block (lane-dense, HW last).
    start = t * tile_hw
    if tile_hw % 128 == 0:
        start = pl.multiple_of(start, 128)
    out_ref[:, pl.ds(start, tile_hw)] = y

    @pl.when(t == n_hw - 1)
    def _finalize():
        inv_hw = 1.0 / float(hw_total)
        mean = sum_ref[...] * inv_hw
        var = sumsq_ref[...] * inv_hw - mean * mean
        var = jnp.maximum(var, 0.0)                 # guard E[y^2]-mean^2 cancellation
        inv = lax.rsqrt(var + eps)
        yf = out_ref[...]
        out_ref[...] = jnp.maximum((yf - mean) * inv, 0.0).astype(out_ref.dtype)


def _im2col_reflect(x, K):
    # x: (N, C, H, W) -> cols: (N, C*K*K, H*W), 'same' reflect padding, stride 1.
    N, C, H, W = x.shape
    p = (K - 1) // 2
    xp = jnp.pad(x, ((0, 0), (0, 0), (p, p), (p, p)), mode="reflect")
    taps = []
    for kh in range(K):
        for kw in range(K):
            taps.append(xp[:, :, kh:kh + H, kw:kw + W])           # (N, C, H, W)
    cols = jnp.stack(taps, axis=2)                                 # (N, C, K*K, H, W)
    return cols.reshape(N, C * K * K, H * W)


def _round_up(v, m):
    return (v + m - 1) // m * m


def _pick_tile(total, preferred, align):
    # Largest divisor of `total` that is <= preferred and a multiple of `align`;
    # fall back to a single full tile if none exists.
    best = None
    for cand in range(align, min(total, preferred) + 1, align):
        if total % cand == 0:
            best = cand
    return best if best is not None else total


def conv_block_forward(x, weight, bias=None, *, eps=1e-5, tile_hw=None, tile_co=None,
                       compute_dtype=jnp.bfloat16):
    """ConvBlock forward: reflect-'same' conv (stride 1) + InstanceNorm2d + ReLU.

    x: (N, C_in, H, W) f32; weight: (C_out, C_in, K, K).
    `bias` is accepted for API parity with the PyTorch module but is intentionally
    unused: a per-channel constant bias is exactly cancelled by the InstanceNorm
    (affine=False) mean subtraction, so it is dead compute.
    """
    del bias
    N, C_in, H, W = x.shape
    C_out, _, K, _ = weight.shape
    HW = H * W
    CKK = C_in * K * K
    CKKp = _round_up(CKK, 8)                 # sublane-align the contraction dim

    # im2col glue (XLA).  bf16 halves the HBM traffic of the 9x-expanded slab.
    cols = _im2col_reflect(x, K).astype(compute_dtype)             # (N, CKK, HW)
    if CKKp != CKK:
        cols = jnp.pad(cols, ((0, 0), (0, CKKp - CKK), (0, 0)))
    w2d = weight.reshape(C_out, CKK).astype(compute_dtype)
    if CKKp != CKK:
        w2d = jnp.pad(w2d, ((0, 0), (0, CKKp - CKK)))

    # Tile choices: HW tiles are multiples of 128 lanes; C_out tiles bound the
    # VMEM-resident output block and give v7x a second parallel grid axis.
    if tile_hw is None:
        tile_hw = _pick_tile(HW, 512, 128)
    if tile_co is None:
        tile_co = C_out if C_out <= 128 else _pick_tile(C_out, 128, 8)
    assert HW % tile_hw == 0 and C_out % tile_co == 0
    n_hw = HW // tile_hw
    n_co = C_out // tile_co

    kernel = functools.partial(_convblock_kernel, eps=eps, tile_hw=tile_hw, hw_total=HW)

    itemsize = jnp.dtype(compute_dtype).itemsize
    cost = pl.CostEstimate(
        flops=2 * N * C_out * CKK * HW,
        transcendentals=0,
        bytes_accessed=cols.size * itemsize + w2d.size * itemsize + N * C_out * HW * 4,
    )

    # NOTE: matmul orientation (C_out rows on the MXU M dim) is tuned for realistic
    # CycleGAN C_out >= 64; for tiny C_out the MXU is underfed but the output stays
    # lane-dense (HW last), which avoids masked partial stores.
    out_flat = pl.pallas_call(
        kernel,
        out_shape=jax.ShapeDtypeStruct((N, C_out, HW), jnp.float32),
        grid_spec=pltpu.PrefetchScalarGridSpec(
            num_scalar_prefetch=0,
            grid=(N, n_co, n_hw),
            in_specs=[
                pl.BlockSpec((None, CKKp, tile_hw), lambda n, c, t: (n, 0, t)),
                pl.BlockSpec((tile_co, CKKp), lambda n, c, t: (c, 0)),
            ],
            out_specs=pl.BlockSpec((None, tile_co, HW), lambda n, c, t: (n, c, 0)),
            scratch_shapes=[
                pltpu.VMEM((tile_co, 1), jnp.float32),   # running sum
                pltpu.VMEM((tile_co, 1), jnp.float32),   # running sum of squares
            ],
        ),
        compiler_params=pltpu.CompilerParams(
            dimension_semantics=("parallel", "parallel", "arbitrary"),
            vmem_limit_bytes=64 * 1024 * 1024,
        ),
        cost_estimate=cost,
    )(cols, w2d)

    return out_flat.reshape(N, C_out, H, W)


def _reference(x, weight, bias, K, eps=1e-5):
    # Pure-JAX f32 reference: conv(same, reflect) + bias + instance norm + relu.
    p = (K - 1) // 2
    xp = jnp.pad(x, ((0, 0), (0, 0), (p, p), (p, p)), mode="reflect")
    y = lax.conv_general_dilated(
        xp, weight, window_strides=(1, 1), padding="VALID",
        dimension_numbers=("NCHW", "OIHW", "NCHW"))
    y = y + bias.reshape(1, -1, 1, 1)
    mean = y.mean(axis=(2, 3), keepdims=True)
    var = ((y - mean) ** 2).mean(axis=(2, 3), keepdims=True)
    return jnp.maximum((y - mean) * lax.rsqrt(var + eps), 0.0)


if __name__ == "__main__":
    # ConvBlock(in_channels=4, out_channels=8, kernel_size=3): stride=1, 'same', reflect, relu
    N, C_in, C_out, K, H, W = 2, 4, 8, 3, 16, 16

    key = jax.random.PRNGKey(0)
    kx, kw, kb = jax.random.split(key, 3)
    x = jax.random.normal(kx, (N, C_in, H, W), dtype=jnp.float32)
    fan_in = C_in * K * K
    bound = 1.0 / (fan_in ** 0.5)                       # PyTorch-style uniform init range
    weight = jax.random.uniform(kw, (C_out, C_in, K, K), jnp.float32, -bound, bound)
    bias = jax.random.uniform(kb, (C_out,), jnp.float32, -bound, bound)

    # tile_hw=128 forces the multi-tile streaming-stats path even at this toy size.
    out = conv_block_forward(x, weight, bias, tile_hw=128)
    out = jax.block_until_ready(out)

    ref = jax.block_until_ready(_reference(x, weight, bias, K))
    assert out.shape == (N, C_out, H, W)
    # bf16 MXU operands (f32 accumulation): compare at a bf16-appropriate tolerance.
    assert jnp.allclose(out, ref, atol=2e-2, rtol=2e-2), float(jnp.abs(out - ref).max())

    print("KERNEL_OK")
</pallas_src>

<mosaic_0001>
module attributes {stable_mosaic.version = 11 : i64} {
  func.func @_convblock_kernel(%arg0: i32, %arg1: i32, %arg2: i32, %arg3: memref<1x40x128xbf16, #tpu.memory_space<vmem>>, %arg4: memref<8x40xbf16, #tpu.memory_space<vmem>>, %arg5: memref<1x8x256xf32, #tpu.memory_space<vmem>>, %arg6: memref<8x1xf32, #tpu.memory_space<vmem>>, %arg7: memref<8x1xf32, #tpu.memory_space<vmem>>) attributes {dimension_semantics = [#tpu.dimension_semantics<parallel>, #tpu.dimension_semantics<parallel>, #tpu.dimension_semantics<arbitrary>], iteration_bounds = array<i64: 2, 1, 2>, scalar_prefetch = 0 : i64, scratch_operands = 2 : i64, tpu.core_type = #tpu.core_type<tc>, window_params = [{transform_indices = @transform_0, window_bounds = array<i64: 1, 40, 128>}, {transform_indices = @transform_1, window_bounds = array<i64: 8, 40>}, {transform_indices = @transform_2, window_bounds = array<i64: 1, 8, 256>}]} {
    %c0_i32 = arith.constant 0 : i32
    %0 = arith.cmpi eq, %arg2, %c0_i32 : i32
    %1 = arith.extui %0 : i1 to i32
    %c0_i32_0 = arith.constant 0 : i32
    %2 = arith.cmpi ne, %1, %c0_i32_0 : i32
    scf.if %2 {
      %cst_18 = arith.constant 0.000000e+00 : f32
      %27 = vector.broadcast %cst_18 : f32 to vector<8x1xf32>
      %c0_19 = arith.constant 0 : index
      %c0_20 = arith.constant 0 : index
      %28 = vector.load %arg6[%c0_19, %c0_20] : memref<8x1xf32, #tpu.memory_space<vmem>>, vector<8x1xf32>
      tpu.vector_store %arg6[%c0_19, %c0_20], %27 {strides = array<i32>} : memref<8x1xf32, #tpu.memory_space<vmem>>, vector<8x1xf32>,
      %cst_21 = arith.constant 0.000000e+00 : f32
      %29 = vector.broadcast %cst_21 : f32 to vector<8x1xf32>
      %c0_22 = arith.constant 0 : index
      %c0_23 = arith.constant 0 : index
      %30 = vector.load %arg7[%c0_22, %c0_23] : memref<8x1xf32, #tpu.memory_space<vmem>>, vector<8x1xf32>
      tpu.vector_store %arg7[%c0_22, %c0_23], %29 {strides = array<i32>} : memref<8x1xf32, #tpu.memory_space<vmem>>, vector<8x1xf32>,
    } else {
    }
    %c0 = arith.constant 0 : index
    %c0_1 = arith.constant 0 : index
    %3 = vector.load %arg4[%c0, %c0_1] : memref<8x40xbf16, #tpu.memory_space<vmem>>, vector<8x40xbf16>
    %c0_2 = arith.constant 0 : index
    %c0_3 = arith.constant 0 : index
    %c0_4 = arith.constant 0 : index
    %4 = vector.load %arg3[%c0_2, %c0_3, %c0_4] : memref<1x40x128xbf16, #tpu.memory_space<vmem>>, vector<1x40x128xbf16>
    %5 = vector.shape_cast %4 : vector<1x40x128xbf16> to vector<40x128xbf16>
    %cst = arith.constant dense<0.000000e+00> : vector<8x128xf32>
    %6 = tpu.matmul %3, %5, %cst {dimension_numbers = #tpu.dot_dimension_numbers<[1], [0], [0], [1], [0, 0, 1, 1], [], []>} : vector<8x40xbf16>, vector<40x128xbf16>, vector<8x128xf32> -> vector<8x128xf32>
    %c0_5 = arith.constant 0 : index
    %c0_6 = arith.constant 0 : index
    %7 = vector.load %arg6[%c0_5, %c0_6] : memref<8x1xf32, #tpu.memory_space<vmem>>, vector<8x1xf32>
    %cst_7 = arith.constant dense<0.000000e+00> : vector<8xf32>
    %8 = vector.multi_reduction <add>, %6, %cst_7 [1] : vector<8x128xf32> to vector<8xf32>
    %9 = vector.shape_cast %8 : vector<8xf32> to vector<8x1xf32>
    %10 = arith.addf %7, %9 : vector<8x1xf32>
    %c0_8 = arith.constant 0 : index
    %c0_9 = arith.constant 0 : index
    %11 = vector.load %arg6[%c0_8, %c0_9] : memref<8x1xf32, #tpu.memory_space<vmem>>, vector<8x1xf32>
    tpu.vector_store %arg6[%c0_8, %c0_9], %10 {strides = array<i32>} : memref<8x1xf32, #tpu.memory_space<vmem>>, vector<8x1xf32>,
    %c0_10 = arith.constant 0 : index
    %c0_11 = arith.constant 0 : index
    %12 = vector.load %arg7[%c0_10, %c0_11] : memref<8x1xf32, #tpu.memory_space<vmem>>, vector<8x1xf32>
    %13 = arith.mulf %6, %6 : vector<8x128xf32>
    %cst_12 = arith.constant dense<0.000000e+00> : vector<8xf32>
    %14 = vector.multi_reduction <add>, %13, %cst_12 [1] : vector<8x128xf32> to vector<8xf32>
    %15 = vector.shape_cast %14 : vector<8xf32> to vector<8x1xf32>
    %16 = arith.addf %12, %15 : vector<8x1xf32>
    %c0_13 = arith.constant 0 : index
    %c0_14 = arith.constant 0 : index
    %17 = vector.load %arg7[%c0_13, %c0_14] : memref<8x1xf32, #tpu.memory_space<vmem>>, vector<8x1xf32>
    tpu.vector_store %arg7[%c0_13, %c0_14], %16 {strides = array<i32>} : memref<8x1xf32, #tpu.memory_space<vmem>>, vector<8x1xf32>,
    %c128_i32 = arith.constant 128 : i32
    %18 = arith.muli %arg2, %c128_i32 : i32
    %19 = tpu.assume_multiple %18, 128 : i32
    %c0_15 = arith.constant 0 : index
    %c0_16 = arith.constant 0 : index
    %20 = arith.index_cast %19 : i32 to index
    %21 = vector.load %arg5[%c0_15, %c0_16, %20] : memref<1x8x256xf32, #tpu.memory_space<vmem>>, vector<1x8x128xf32>
    %22 = vector.shape_cast %21 : vector<1x8x128xf32> to vector<8x128xf32>
    %23 = vector.shape_cast %6 : vector<8x128xf32> to vector<1x8x128xf32>
    tpu.vector_store %arg5[%c0_15, %c0_16, %20], %23 {strides = array<i32>} : memref<1x8x256xf32, #tpu.memory_space<vmem>>, vector<1x8x128xf32>,
    %c1_i32 = arith.constant 1 : i32
    %24 = arith.cmpi eq, %arg2, %c1_i32 : i32
    %25 = arith.extui %24 : i1 to i32
    %c0_i32_17 = arith.constant 0 : i32
    %26 = arith.cmpi ne, %25, %c0_i32_17 : i32
    scf.if %26 {
      %c0_18 = arith.constant 0 : index
      %c0_19 = arith.constant 0 : index
      %27 = vector.load %arg6[%c0_18, %c0_19] : memref<8x1xf32, #tpu.memory_space<vmem>>, vector<8x1xf32>
      %cst_20 = arith.constant 3.906250e-03 : f32
      %28 = vector.broadcast %cst_20 : f32 to vector<8x1xf32>
      %29 = arith.mulf %27, %28 : vector<8x1xf32>
      %c0_21 = arith.constant 0 : index
      %c0_22 = arith.constant 0 : index
      %30 = vector.load %arg7[%c0_21, %c0_22] : memref<8x1xf32, #tpu.memory_space<vmem>>, vector<8x1xf32>
      %cst_23 = arith.constant 3.906250e-03 : f32
      %31 = vector.broadcast %cst_23 : f32 to vector<8x1xf32>
      %32 = arith.mulf %30, %31 : vector<8x1xf32>
      %33 = arith.mulf %29, %29 : vector<8x1xf32>
      %34 = arith.subf %32, %33 : vector<8x1xf32>
      %cst_24 = arith.constant 0.000000e+00 : f32
      %35 = vector.broadcast %cst_24 : f32 to vector<8x1xf32>
      %36 = arith.maximumf %34, %35 : vector<8x1xf32>
      %cst_25 = arith.constant 9.99999974E-6 : f32
      %37 = vector.broadcast %cst_25 : f32 to vector<8x1xf32>
      %38 = arith.addf %36, %37 : vector<8x1xf32>
      %39 = math.rsqrt %38 : vector<8x1xf32>
      %c0_26 = arith.constant 0 : index
      %c0_27 = arith.constant 0 : index
      %c0_28 = arith.constant 0 : index
      %40 = vector.load %arg5[%c0_26, %c0_27, %c0_28] : memref<1x8x256xf32, #tpu.memory_space<vmem>>, vector<1x8x256xf32>
      %41 = vector.shape_cast %40 : vector<1x8x256xf32> to vector<8x256xf32>
      %42 = vector.broadcast %29 : vector<8x1xf32> to vector<8x256xf32>
      %43 = arith.subf %41, %42 : vector<8x256xf32>
      %44 = vector.broadcast %39 : vector<8x1xf32> to vector<8x256xf32>
      %45 = arith.mulf %43, %44 : vector<8x256xf32>
      %cst_29 = arith.constant 0.000000e+00 : f32
      %46 = vector.broadcast %cst_29 : f32 to vector<8x256xf32>
      %47 = arith.maximumf %45, %46 : vector<8x256xf32>
      %c0_30 = arith.constant 0 : index
      %c0_31 = arith.constant 0 : index
      %c0_32 = arith.constant 0 : index
      %48 = vector.load %arg5[%c0_30, %c0_31, %c0_32] : memref<1x8x256xf32, #tpu.memory_space<vmem>>, vector<1x8x256xf32>
      %49 = vector.shape_cast %48 : vector<1x8x256xf32> to vector<8x256xf32>
      %50 = vector.shape_cast %47 : vector<8x256xf32> to vector<1x8x256xf32>
      tpu.vector_store %arg5[%c0_30, %c0_31, %c0_32], %50 {strides = array<i32>} : memref<1x8x256xf32, #tpu.memory_space<vmem>>, vector<1x8x256xf32>,
    } else {
    }
    return
  }
  func.func @transform_0(%arg0: i32, %arg1: i32, %arg2: i32) -> (i32, i32, i32) {
    %c0_i32 = arith.constant 0 : i32
    %c0_i32_0 = arith.constant 0 : i32
    return %arg0, %c0_i32, %arg2 : i32, i32, i32
  }
  func.func @transform_1(%arg0: i32, %arg1: i32, %arg2: i32) -> (i32, i32) {
    %c0_i32 = arith.constant 0 : i32
    %c0_i32_0 = arith.constant 0 : i32
    return %arg1, %c0_i32 : i32, i32
  }
  func.func @transform_2(%arg0: i32, %arg1: i32, %arg2: i32) -> (i32, i32, i32) {
    %c0_i32 = arith.constant 0 : i32
    %c0_i32_0 = arith.constant 0 : i32
    return %arg0, %arg1, %c0_i32 : i32, i32, i32
  }
}

</mosaic_0001>

<llo_original>
// kernel: tpu_custom_call.1
$region0: #{tpu_custom_call.1}
  #allocation0 [shape = 'u32[]', space=smem, size = 0x4, offset = 0x4, fixed_abs, tag = 'smem constant byte address 0x4 - core index']
  #allocation1 [shape = 'u32[144,128]{1,0:T(1,128)}', space=vmem, size = 0x12000, scoped, tag = 'internal scratch']
  #allocation2 [shape = 'f32[8,1]{1,0:T(8,128)}', space=vmem, size = 0x1000, scoped, tag = 'scratch operand']
  #allocation3 [shape = 'f32[8,1]{1,0:T(8,128)}', space=vmem, size = 0x1000, scoped, tag = 'scratch operand']
  %s0 = inlined_call_operand.hbm [shape: bf16[2,40,256], index: 0, kind: input, shape index: {}]
  %s1 = inlined_call_operand.hbm [shape: bf16[8,40], index: 1, kind: input, shape index: {}]
  %s2 = inlined_call_operand.hbm [shape: f32[2,8,256], index: 2, kind: output, shape index: {}]
  %s3 = sld [smem:[#allocation0]]
  $region57: #{tpu_custom_call.1} parent=0
    _
  %s5 = ssub.s32 1, %s3
  %s6 = scalar_select 0, %s5, %s3
  $region1: #{tpu_custom_call.1} parent=0
    #allocation4 [shape = 'u8[20480]{0}', space=vmem, size = 0x5000, scoped, tag = 'input window, operand 0']
    #allocation5 [shape = 's32[2]{0}', space=sflag, size = 0x8, scoped, tag = 'scoped memory for tpu_custom_call.1']
    #allocation6 [shape = 's32[2]{0}', space=sflag, size = 0x8, scoped, tag = 'scoped memory for tpu_custom_call.1']
    #allocation7 [shape = 'u8[2048]{0}', space=vmem, size = 0x800, scoped, tag = 'input window, operand 1, single buffered']
    #allocation8 [shape = 's32[1]{0}', space=sflag, size = 0x4, scoped, tag = 'scoped memory for tpu_custom_call.1']
    #allocation9 [shape = 'u8[16384]{0}', space=vmem, size = 0x4000, scoped, tag = 'output window, operand 0']
    %7 = vsyncpa [#allocation5], 0
    %s8 = scalar_lea.sflag [#allocation5], 1
    %9 = vsyncpa %s8, 0
    %10 = vsyncpa [#allocation8], 0
    %11 = vsyncpa [#allocation6], 0
    %s12 = scalar_lea.sflag [#allocation6], 1
    %13 = vsyncpa %s12, 0
    loop: start=0, step=1, limit=6
    $region2: #{tpu_custom_call.1} parent=1 // loop_pre_header
      _
    $region3: #{tpu_custom_call.1} parent=1 // loop_header
      %s15 = sphi 0, %s19
      %p16 = scmp.ge.s32.totalorder %s15, 6
      %s22 = sphi 0, %s41
      %s23 = sphi 0, %s37
      %s24 = sphi 0, %s33
      %s25 = sphi 0, %s22
      %s26 = sphi 0, %s23
      %s27 = sphi 0, %s24
      %s28 = sphi 0, %s25
      %s29 = sphi 0, %s26
      %s30 = sphi 0, %s27
      %s46 = sphi 0, %s48
      %s49 = sphi 0, %s46
      %s50 = sphi 0, %s49
      %s66 = sphi 0, %s50
      %s72 = sphi 0, %s74
      %s75 = sphi 0, %s72
      %s76 = sphi 0, %s75
      %s92 = sphi 0, %s76
      %s100 = sphi 0, %s102
      %s103 = sphi 0, %s100
      %s104 = sphi 0, %s103
      %s120 = sphi 0, %s104
    $region4: #{tpu_custom_call.1} parent=1 // loop_header_branch
      %18 = sbr.rel (%p16) target = $region8
    $region5: #{tpu_custom_call.1} parent=1 // loop_body
      %s20 = ssub.s32 %s15, 1
      %s21 = ssub.s32 %s15, 2
      %s31 = sadd.s32 1, %s24
      %p32 = scmp.ge.s32.totalorder %s31, 2
      %s33 = scalar_select %p32, 0, %s31
      %s34 = sadd.s32 1, %s23
      %s35 = scalar_select %p32, %s34, %s23
      %p36 = scmp.ge.s32.totalorder %s35, 1
      %s37 = scalar_select %p36, 0, %s35
      %s38 = sadd.s32 1, %s22
      %s39 = scalar_select %p36, %s38, %s22
      %p40 = scmp.ge.s32.totalorder %s39, 2
      %s41 = scalar_select %p40, 0, %s39
      %s42 = ssub.s32 %s22, %s41
      %s43 = ssub.s32 %s24, %s33
      %s44 = sor.u32 %s42, %s43
      %p45 = scmp.eq.s32.totalorder %s44, 0
      %s47 = sadd.s32 %s46, 1
      %s48 = scalar_select %p45, %s46, %s47
      %p51 = pneg %p45
      %p52 = scmp.eq.s32.totalorder %s15, 3
      %p53 = por %p51, %p52
      %p54 = scmp.ne.s32.totalorder %s46, %s49
      %p55 = scmp.eq.s32.totalorder %s15, 0
      %p56 = por %p54, %p55
      %p57 = scmp.ne.s32.totalorder %s46, %s49
      %p58 = scmp.eq.s32.totalorder %s20, 3
      %p59 = por %p57, %p58
      %p60 = scmp.ne.s32.totalorder %s49, %s50
      %p61 = scmp.eq.s32.totalorder %s20, 0
      %p62 = por %p60, %p61
      %p63 = scmp.ne.s32.totalorder %s49, %s50
      %p64 = scmp.eq.s32.totalorder %s21, 3
      %p65 = por %p63, %p64
      %p67 = scmp.ne.s32.totalorder %s50, %s66
      %p68 = scmp.eq.s32.totalorder %s21, 0
      %p69 = por %p67, %p68
      %s70 = ssub.s32 %s23, %s37
      %p71 = scmp.eq.s32.totalorder %s70, 0
      %s73 = sadd.s32 %s72, 1
      %s74 = scalar_select %p71, %s72, %s73
      %p77 = pneg %p71
      %p78 = scmp.eq.s32.totalorder %s15, 3
      %p79 = por %p77, %p78
      %p80 = scmp.ne.s32.totalorder %s72, %s75
      %p81 = scmp.eq.s32.totalorder %s15, 0
      %p82 = por %p80, %p81
      %p83 = scmp.ne.s32.totalorder %s72, %s75
      %p84 = scmp.eq.s32.totalorder %s20, 3
      %p85 = por %p83, %p84
      %p86 = scmp.ne.s32.totalorder %s75, %s76
      %p87 = scmp.eq.s32.totalorder %s20, 0
      %p88 = por %p86, %p87
      %p89 = scmp.ne.s32.totalorder %s75, %s76
      %p90 = scmp.eq.s32.totalorder %s21, 3
      %p91 = por %p89, %p90
      %p93 = scmp.ne.s32.totalorder %s76, %s92
      %p94 = scmp.eq.s32.totalorder %s21, 0
      %p95 = por %p93, %p94
      %s96 = ssub.s32 %s22, %s41
      %s97 = ssub.s32 %s23, %s37
      %s98 = sor.u32 %s96, %s97
      %p99 = scmp.eq.s32.totalorder %s98, 0
      %s101 = sadd.s32 %s100, 1
      %s102 = scalar_select %p99, %s100, %s101
      %p105 = pneg %p99
      %p106 = scmp.eq.s32.totalorder %s15, 3
      %p107 = por %p105, %p106
      %p108 = scmp.ne.s32.totalorder %s100, %s103
      %p109 = scmp.eq.s32.totalorder %s15, 0
      %p110 = por %p108, %p109
      %p111 = scmp.ne.s32.totalorder %s100, %s103
      %p112 = scmp.eq.s32.totalorder %s20, 3
      %p113 = por %p111, %p112
      %p114 = scmp.ne.s32.totalorder %s103, %s104
      %p115 = scmp.eq.s32.totalorder %s20, 0
      %p116 = por %p114, %p115
      %p117 = scmp.ne.s32.totalorder %s103, %s104
      %p118 = scmp.eq.s32.totalorder %s21, 3
      %p119 = por %p117, %p118
      %p121 = scmp.ne.s32.totalorder %s104, %s120
      %p122 = scmp.eq.s32.totalorder %s21, 0
      %p123 = por %p121, %p122
      %p124 = scmp.le.s32.totalorder 1, %s15
      %p125 = scmp.lt.s32.totalorder %s15, 5
      %p126 = pnand %p124, %p125
      %p127 = pneg %p126
      // Predicated region
      $region9: #{tpu_custom_call.1} parent=5 // pred_check
        _
      $region10: #{tpu_custom_call.1} parent=5 // pred_check_branch
        %129 = sbr.rel (%p126) target = $region12
      $region11: #{tpu_custom_call.1} parent=5 // pred_region
        %s130 = ssub.s32 %s15, 1
        // Predicated region
        $region13: #{tpu_custom_call.1} parent=11 // pred_check
          %p131 = pneg %p88
        $region14: #{tpu_custom_call.1} parent=11 // pred_check_branch
          %133 = sbr.rel (%p131) target = $region16
        $region15: #{tpu_custom_call.1} parent=11 // pred_region
          %s135 = ssub.s32 64, 64
          %136 = vsyncadd [#allocation8], %s135
          %s137 = smul.addr %s26, 64
          %s138 = scalar_lea.hbm %s1, %s137
          %s140 = sshll.u32 [#allocation7], 4
          %s141 = int_to_ptr.vmem [resolvable:$true] %s140
          %143 = dma.hbm_to_vmem [thread:$0]  %s138, 64, %s141, [#allocation8]
        $region16: #{tpu_custom_call.1} parent=11 // pred_fallthru
          _
      $region12: #{tpu_custom_call.1} parent=5 // pred_fallthru
        _
      %p144 = scmp.lt.s32.totalorder %s15, 4
      // Predicated region
      $region17: #{tpu_custom_call.1} parent=5 // pred_check
        %p145 = pneg %p144
      $region18: #{tpu_custom_call.1} parent=5 // pred_check_branch
        %147 = sbr.rel (%p145) target = $region20
      $region19: #{tpu_custom_call.1} parent=5 // pred_region
        // Predicated region
        $region21: #{tpu_custom_call.1} parent=19 // pred_check
          %p148 = pneg %p56
        $region22: #{tpu_custom_call.1} parent=19 // pred_check_branch
          %150 = sbr.rel (%p148) target = $region24
        $region23: #{tpu_custom_call.1} parent=19 // pred_region
          %s151 = sand.u32 %s46, 1
          %s152 = scalar_lea.sflag [#allocation5], %s151
          %s153 = sand.u32 %s46, 1
          %s154 = smul.addr %s153, 20
          %s155 = scalar_lea.vmem [#allocation4], %s154
          %s157 = ssub.s32 320, 320
          %158 = vsyncadd %s152, %s157
          %s159 = smul.addr %s22, 10
          %s160 = sadd.s32 %s24, %s159
          %s161 = smul.addr %s160, 64
          %s162 = scalar_lea.hbm %s0, %s161
          %s163 = sshll.u32 %s155, 4
          %s164 = int_to_ptr.vmem [resolvable:$true] %s163
          %169 = dma.hbm_to_vmem [thread:$0]  %s162, 320, %s164, %s152, 128, 64, 4
        $region24: #{tpu_custom_call.1} parent=19 // pred_fallthru
          _
      $region20: #{tpu_custom_call.1} parent=5 // pred_fallthru
        _
      %p170 = scmp.le.s32.totalorder 1, %s15
      %p171 = scmp.lt.s32.totalorder %s15, 5
      %p172 = pnand %p170, %p171
      %p173 = pneg %p172
      // Predicated region
      $region25: #{tpu_custom_call.1} parent=5 // pred_check
        _
      $region26: #{tpu_custom_call.1} parent=5 // pred_check_branch
        %175 = sbr.rel (%p172) target = $region28
      $region27: #{tpu_custom_call.1} parent=5 // pred_region
        %s176 = ssub.s32 %s15, 1
        %s177 = sand.u32 %s49, 1
        %s178 = scalar_lea.sflag [#allocation5], %s177
        %s179 = sand.u32 %s49, 1
        %s180 = smul.addr %s179, 20
        %s181 = scalar_lea.vmem [#allocation4], %s180
        // Predicated region
        $region29: #{tpu_custom_call.1} parent=27 // pred_check
          %p182 = pneg %p62
        $region30: #{tpu_custom_call.1} parent=27 // pred_check_branch
          %184 = sbr.rel (%p182) target = $region32
        $region31: #{tpu_custom_call.1} parent=27 // pred_region
          %185 = dma.done %s178, 320
        $region32: #{tpu_custom_call.1} parent=27 // pred_fallthru
          _
        // Predicated region
        $region33: #{tpu_custom_call.1} parent=27 // pred_check
          %p186 = pneg %p88
        $region34: #{tpu_custom_call.1} parent=27 // pred_check_branch
          %188 = sbr.rel (%p186) target = $region36
        $region35: #{tpu_custom_call.1} parent=27 // pred_region
          %189 = dma.done [#allocation8], 64
        $region36: #{tpu_custom_call.1} parent=27 // pred_fallthru
          _
        %s190 = sand.u32 %s49, 1
        %s191 = scalar_lea.sflag [#allocation5], %s190
        %s192 = sand.u32 %s49, 1
        %s193 = smul.addr %s192, 20
        %s194 = scalar_lea.vmem [#allocation4], %s193
        %p195 = pneg %p62
        %p196 = pneg %p59
        %p197 = pneg %p88
        %p198 = pneg %p85
        %p199 = pneg %p116
        %p200 = pneg %p113
        %s201 = sand.u32 %s103, 1
        %s202 = scalar_lea.sflag [#allocation6], %s201
        %s203 = sand.u32 %s103, 1
        %s204 = smul.addr %s203, 16
        %s205 = scalar_lea.vmem [#allocation9], %s204
        %p207 = scmp.eq.s32.totalorder %s27, 0
        // Predicated region
        $region37: #{tpu_custom_call.1} parent=27 // pred_check
          %p208 = pneg %p207
        $region38: #{tpu_custom_call.1} parent=27 // pred_check_branch
          %210 = sbr.rel (%p208) target = $region40
        $region39: #{tpu_custom_call.1} parent=27 // pred_region
          %vm211 = vcmask 7168
          %212 = vst.msk [vmem:[#allocation2] sm:$0xff] %vm211, 0.0
          %213 = vst.msk [vmem:[#allocation3] sm:$0xff] %vm211, 0.0
        $region40: #{tpu_custom_call.1} parent=27 // pred_fallthru
          _
        %v214 = vld [vmem:[#allocation7] sm:$0xf]
        %v215 = vld [vmem:[%s181] sm:$0xf]
        %v216 = vld [vmem:[%s181 + $0x4] sm:$0xf]
        %v217 = vld [vmem:[%s181 + $0x8] sm:$0xf]
        %v218 = vld [vmem:[%s181 + $0xc] sm:$0xf]
        %v219 = vld [vmem:[%s181 + $0x10] sm:$0xf]
        %v225 = vunpack.c.l.b16 %v215
        %v226 = vunpack.c.l.b16 %v216
        %v227 = vunpack.c.l.b16 %v217
        %v228 = vunpack.c.l.b16 %v218
        %v229 = vunpack.c.l.b16 %v219
        %v230 = vpack.c.b16 %v226, %v225
        %v231 = vpack.c.b16 %v228, %v227
        %v232 = vpack.c.b16 %v229, %v229
        %vm235 = vcmask 326656
        %v237 = vsel %vm235, %v214, 0
        %vm239 = vcmask 1043456
        %v241 = vsel %vm239, %v232, 0
        %243 = vmatprep.subr.bf16.mxu0 0
        %244 = vmatpush1.bf16.msra.mxu0 0
        %245 = vmatprep.subr.bf16.mxu0 0
        %246 = vmatpush1.bf16.msra.mxu0 0
        %247 = vmatprep.subr.bf16.mxu0 0
        %248 = vmatpush1.bf16.msra.mxu0 0
        %249 = vmatprep.subr.bf16.mxu0 0
        %250 = vmatpush1.bf16.msra.mxu0 0
        %251 = vmatprep.subr.bf16.mxu0 0
        %252 = vmatpush1.bf16.msra.mxu0 0
        %253 = vmatprep.subr.bf16.mxu0 0
        %254 = vmatpush1.bf16.msra.mxu0 %v241
        %255 = vmatprep.subr.bf16.mxu0 0
        %256 = vmatpush1.bf16.msra.mxu0 %v231
        %257 = vmatprep.subr.bf16.mxu0 0
        %258 = vmatpush1.bf16.msra.mxu0 %v230
        %259 = vmatprep.subr.bf16.mxu0 0
        %260 = vmatpush2.bf16.msra.mxu0 0
        %261 = vmatprep.subr.bf16.mxu0 0
        %262 = vmatpush2.bf16.msra.mxu0 0
        %263 = vmatprep.subr.bf16.mxu0 0
        %264 = vmatpush2.bf16.msra.mxu0 0
        %265 = vmatprep.subr.bf16.mxu0 0
        %266 = vmatpush2.bf16.msra.mxu0 0
        %267 = vmatprep.subr.bf16.mxu0 0
        %268 = vmatpush2.bf16.msra.mxu0 0
        %269 = vmatprep.subr.bf16.mxu0 0
        %270 = vmatpush2.bf16.msra.mxu0 0
        %271 = vmatprep.subr.bf16.mxu0 0
        %272 = vmatpush2.bf16.msra.mxu0 0
        %273 = vmatprep.subr.bf16.mxu0 0
        %274 = vmatpush2.bf16.msra.mxu0 0
        %275 = vmatprep.mubr.bf16.mxu0 0
        %276 = vmatmul.mubr.bf16.gmra.mxu0 %v237
        %v277 = vpop.f32.mrf.mxu0
        %v278 = vadd.f32 0.0, %v277
        %v279 = vpop.f32.mrf.mxu0
        %v280 = vpop.f32.mrf.mxu0
        %v281 = vpop.f32.mrf.mxu0
        %282 = vdwg.mxu0
        %v283 = vld [vmem:[#allocation2] sm:$0xff]
        %284 = vadd.xlane.f32.xlu0 %v278
        %v285 = vpop.xlane.xlu0 %284
        %v286 = vadd.f32 %v283, %v285
        %vm287 = vcmask 7168
        %288 = vst.msk [vmem:[#allocation2] sm:$0xff] %vm287, %v286
        %v289 = vld [vmem:[#allocation3] sm:$0xff]
        %v290 = vmul.f32 %v278, %v278
        %291 = vadd.xlane.f32.xlu0 %v290
        %v292 = vpop.xlane.xlu0 %291
        %v293 = vadd.f32 %v289, %v292
        %294 = vst.msk [vmem:[#allocation3] sm:$0xff] %vm287, %v293
        %s295 = smul.u32 %s27, 128
        %s296 = sshra.s32 %s295, 7
        %s297 = sand.u32 %s295, 127
        %s298 = smul.addr %s296, 8
        %s299 = scalar_lea.vmem %s205, %s298 [#allocation9]
        %300 = vst [vmem:[%s299] sm:$0xff] %v278
        %p301 = scmp.eq.s32.totalorder %s27, 1
        // Predicated region
        $region41: #{tpu_custom_call.1} parent=27 // pred_check
          %p302 = pneg %p301
        $region42: #{tpu_custom_call.1} parent=27 // pred_check_branch
          %304 = sbr.rel (%p302) target = $region44
        $region43: #{tpu_custom_call.1} parent=27 // pred_region
          %v305 = vld [vmem:[#allocation2] sm:$0xff]
          %v306 = vmul.f32 %v305, 0.00390625
          %v307 = vld [vmem:[#allocation3] sm:$0xff]
          %v308 = vmul.f32 %v307, 0.00390625
          %v309 = vmul.f32 %v306, %v306
          %v310 = vsub.f32 %v308, %v309
          %v311 = vmax.f32 %v310, 0.0
          %v312 = vadd.f32 %v311, 1e-05
          %v313 = vrsqrt.pop %v312
          %v314 = vld [vmem:[%s205] sm:$0xff]
          %v315 = vld [vmem:[%s205 + $0x8] sm:$0xff]
          %317 = vset.pattern.permute.xlu0 0
          %318 = vperm.xlu0 %317, %v306
          %v319 = vpop.permute.xlu0 %318
          %v321 = vsub.f32 %v314, %v319
          %v322 = vsub.f32 %v315, %v319
          %324 = vset.pattern.permute.xlu0 0
          %325 = vperm.xlu0 %324, %v313
          %v326 = vpop.permute.xlu0 %325
          %v328 = vmul.f32 %v321, %v326
          %v329 = vmul.f32 %v322, %v326
          %v330 = vmax.f32 %v328, 0.0
          %v331 = vmax.f32 %v329, 0.0
          %332 = vst [vmem:[%s205] sm:$0xff] %v330
          %333 = vst [vmem:[%s205 + $0x8] sm:$0xff] %v331
        $region44: #{tpu_custom_call.1} parent=27 // pred_fallthru
          _
        %s334 = sand.u32 %s103, 1
        %s335 = scalar_lea.sflag [#allocation6], %s334
        %s336 = sand.u32 %s103, 1
        %s337 = smul.addr %s336, 16
        %s338 = scalar_lea.vmem [#allocation9], %s337
        // Predicated region
        $region45: #{tpu_custom_call.1} parent=27 // pred_check
          %p339 = pneg %p113
        $region46: #{tpu_custom_call.1} parent=27 // pred_check_branch
          %341 = sbr.rel (%p339) target = $region48
        $region47: #{tpu_custom_call.1} parent=27 // pred_region
          %s343 = ssub.s32 256, 256
          %344 = vsyncadd %s335, %s343
          %s345 = smul.addr %s26, 2
          %s346 = smul.addr %s25, 2
          %s347 = sadd.s32 %s345, %s346
          %s348 = smul.addr %s347, 128
          %s349 = scalar_lea.hbm %s2, %s348
          %s351 = sshll.u32 %s338, 4
          %s352 = int_to_ptr.vmem [resolvable:$true] %s351
          %354 = dma.vmem_to_hbm [thread:$0]  %s352, 256, %s349, %s335
        $region48: #{tpu_custom_call.1} parent=27 // pred_fallthru
          _
      $region28: #{tpu_custom_call.1} parent=5 // pred_fallthru
        _
      %p355 = scmp.le.s32.totalorder 2, %s15
      // Predicated region
      $region49: #{tpu_custom_call.1} parent=5 // pred_check
        %p356 = pneg %p355
      $region50: #{tpu_custom_call.1} parent=5 // pred_check_branch
        %358 = sbr.rel (%p356) target = $region52
      $region51: #{tpu_custom_call.1} parent=5 // pred_region
        %s359 = ssub.s32 %s15, 2
        // Predicated region
        $region53: #{tpu_custom_call.1} parent=51 // pred_check
          %p360 = pneg %p119
        $region54: #{tpu_custom_call.1} parent=51 // pred_check_branch
          %362 = sbr.rel (%p360) target = $region56
        $region55: #{tpu_custom_call.1} parent=51 // pred_region
          %s363 = sand.u32 %s104, 1
          %s364 = scalar_lea.sflag [#allocation6], %s363
          %s365 = sand.u32 %s104, 1
          %s366 = smul.addr %s365, 16
          %s367 = scalar_lea.vmem [#allocation9], %s366
          %368 = dma.done %s364, 256
        $region56: #{tpu_custom_call.1} parent=51 // pred_fallthru
          _
      $region52: #{tpu_custom_call.1} parent=5 // pred_fallthru
        _
    $region6: #{tpu_custom_call.1} parent=1 // loop_footer
      %s19 = sadd.s32 1, %s15
    $region7: #{tpu_custom_call.1} parent=1 // loop_footer_branch
      %14 = sbr.rel target = $region3
    $region8: #{tpu_custom_call.1} parent=1 // loop_exit
      _
    %369 = vsyncpa [#allocation5], 1
    %s370 = scalar_lea.sflag [#allocation5], 1
    %371 = vsyncpa %s370, 1
    %372 = vsyncpa [#allocation8], 1
    %373 = vsyncpa [#allocation6], 1
    %s374 = scalar_lea.sflag [#allocation6], 1
    %375 = vsyncpa %s374, 1

</llo_original>
